<compile_context>
chip_gen: v7x
topology: tpu7x:2x2x1
jax: 0.10.0
libtpu: 0.0.40
codegen_flags: <defaults>
</compile_context>

<pallas_src>
import functools

import jax
import jax.numpy as jnp
from jax.experimental import pallas as pl
from jax.experimental.pallas import tpu as pltpu


# ---------------------------------------------------------------------------
# Activation (f32 math; sigmoid goes to the EUP, where/mul to the VPU)
# ---------------------------------------------------------------------------
def _apply_act(z, a, activation):
    if activation == 'prelu':
        return jnp.where(z >= 0, z, a * z)          # nn.PReLU() (single shared slope)
    elif activation == 'dice':
        s = jax.nn.sigmoid(z)                       # Dice per spec (scalar alpha, no BN)
        return a * (1.0 - s) * z + s * z
    return jnp.maximum(z, 0.0)                      # relu


# ---------------------------------------------------------------------------
# Kernel: one (batch-block, time-tile) slab of the attention-scoring MLP.
# ---------------------------------------------------------------------------
def _lau_kernel(scalars_ref, q_ref, bias1_ref, k_ref, *refs, activation, num_hidden):
    # refs layout: [W_kd, W_m, (W_2, b_2), ..., (W_L, b_L), w_fc_row, out_ref]
    out_ref = refs[-1]
    w_refs = refs[:-1]

    bb, tt, e = k_ref.shape
    rows = bb * tt

    k = k_ref[...].astype(jnp.float32)               # (bb, tt, E)
    q = q_ref[...].astype(jnp.float32)               # (bb, 1, E)
    qk = q * k                                       # VPU broadcast-mul, f32

    k2 = k.reshape(rows, e)
    qk2 = qk.reshape(rows, e)

    # Layer 1 with the concat folded into split weights:
    #   z1 = k @ (Wk - Wd) + (q*k) @ Wm + [q @ (Wq + Wd) + b1]
    w_kd = w_refs[0][...]                            # (E, u1) bf16
    w_m = w_refs[1][...]                             # (E, u1) bf16
    z = jnp.dot(k2.astype(jnp.bfloat16), w_kd, preferred_element_type=jnp.float32)
    z = z + jnp.dot(qk2.astype(jnp.bfloat16), w_m, preferred_element_type=jnp.float32)
    u1 = z.shape[-1]
    z = z.reshape(bb, tt, u1) + bias1_ref[...]       # per-batch bias row (bb, 1, u1)
    h = _apply_act(z, scalars_ref[0], activation).reshape(rows, u1)

    # Remaining hidden layers (bf16 MXU operands, f32 accumulation + activations).
    off = 2
    for l in range(1, num_hidden):
        w = w_refs[off][...]                         # (u_prev, u_l) bf16, VMEM-resident
        b = w_refs[off + 1][...]                     # (1, u_l) f32
        off += 2
        z = jnp.dot(h.astype(jnp.bfloat16), w, preferred_element_type=jnp.float32) + b
        h = _apply_act(z, scalars_ref[l], activation)

    # Final fc: VPU multiply + lane reduce (no N=1 MXU matmul); lane-dense store.
    w_fc = w_refs[off][...]                          # (1, H_last) f32
    h3 = h.reshape(bb, tt, h.shape[-1])
    att = jnp.sum(h3 * w_fc, axis=-1) + scalars_ref[num_hidden]   # (bb, tt)
    out_ref[:, 0, :] = att.astype(out_ref.dtype)


# ---------------------------------------------------------------------------
# Wrapper: reproduces LocalActivationUnit.forward
# ---------------------------------------------------------------------------
def local_activation_unit(query, keys, params, *, activation='prelu', rows_per_step=512):
    """query: (B, 1, E); keys: (B, T, E) (any float dtype; pass bf16 keys to halve
    HBM traffic). Returns attention scores (B, T) in float32."""
    B, T, E = keys.shape
    hidden = params['hidden']                  # [(W (unit,in), b (unit,)), ...] torch layout
    act_p = params['act']                      # per-layer scalar (PReLU slope / Dice alpha)
    w_fc, b_fc = params['fc']                  # (1, H_last), (1,)
    L = len(hidden)

    # ---- Fold the [q, k, q-k, q*k] concat into split layer-1 weights ----
    w1 = jnp.asarray(hidden[0][0], jnp.float32)            # (u1, 4E)
    b1 = jnp.asarray(hidden[0][1], jnp.float32)            # (u1,)
    w_q, w_k, w_d, w_m = (w1[:, 0:E], w1[:, E:2 * E], w1[:, 2 * E:3 * E], w1[:, 3 * E:4 * E])
    q2 = jnp.asarray(query, jnp.float32).reshape(B, E)
    bias1 = (q2 @ (w_q + w_d).T + b1)[:, None, :]          # (B, 1, u1) per-batch bias row
    u1 = bias1.shape[-1]

    # Weights resident in VMEM; matmul operands in bf16 (fc row stays f32 for the VPU).
    w_args = [(w_k - w_d).T.astype(jnp.bfloat16),          # (E, u1)
              w_m.T.astype(jnp.bfloat16)]                  # (E, u1)
    for (w, b) in hidden[1:]:
        w_args.append(jnp.asarray(w, jnp.float32).T.astype(jnp.bfloat16))   # (u_prev, u)
        w_args.append(jnp.asarray(b, jnp.float32)[None, :])                 # (1, u)
    w_args.append(jnp.asarray(w_fc, jnp.float32).reshape(1, -1))            # (1, H_last)

    # Small scalars -> SMEM: [act_0, ..., act_{L-1}, fc_bias]
    scalars = jnp.concatenate([jnp.asarray(act_p, jnp.float32).reshape(L),
                               jnp.asarray(b_fc, jnp.float32).reshape(1)])

    # ---- Block sizing: big tiles; pack batch rows per step when T is short ----
    rows_per_step = max(int(rows_per_step), 8)
    if T % 8 == 0 and T < rows_per_step:
        tt = T                                         # full T (keeps in-kernel reshapes free)
        bb = min(B, max(1, rows_per_step // T))        # pack batches per step
    else:
        bb = 1
        tt = T if T <= rows_per_step else max(128, (rows_per_step // 128) * 128)

    grid = (pl.cdiv(B, bb), pl.cdiv(T, tt))            # no pad: edge blocks masked on store

    kernel = functools.partial(_lau_kernel, activation=activation, num_hidden=L)

    in_specs = [
        pl.BlockSpec(memory_space=pltpu.MemorySpace.SMEM),        # activation scalars + fc bias
        pl.BlockSpec((bb, 1, E), lambda b, t: (b, 0, 0)),         # query rows (never broadcast in HBM)
        pl.BlockSpec((bb, 1, u1), lambda b, t: (b, 0, 0)),        # folded per-batch layer-1 bias
        pl.BlockSpec((bb, tt, E), lambda b, t: (b, t, 0)),        # keys tile (passed through, no pad/cast)
    ] + [pl.BlockSpec(w.shape, lambda b, t: (0, 0)) for w in w_args]   # weights: VMEM-resident

    out = pl.pallas_call(
        kernel,
        out_shape=jax.ShapeDtypeStruct((B, 1, T), jnp.float32),   # lane-dense output blocks
        grid=grid,
        in_specs=in_specs,
        out_specs=pl.BlockSpec((bb, 1, tt), lambda b, t: (b, 0, t)),
        compiler_params=pltpu.CompilerParams(
            dimension_semantics=("parallel", "parallel")),
    )(scalars, q2[:, None, :], bias1, keys, *w_args)

    return out[:, 0, :]


# ---------------------------------------------------------------------------
# Pure-JAX f32 reference (mirrors the PyTorch module) for correctness checking
# ---------------------------------------------------------------------------
def _lau_ref(query, keys, params, activation):
    B, T, E = keys.shape
    q = jnp.broadcast_to(jnp.asarray(query, jnp.float32).reshape(B, 1, E), (B, T, E))
    k = jnp.asarray(keys, jnp.float32)
    h = jnp.concatenate([q, k, q - k, q * k], axis=-1)
    for (w, b), a in zip(params['hidden'], params['act']):
        z = h @ w.T + b
        if activation == 'prelu':
            h = jnp.where(z >= 0, z, a * z)
        elif activation == 'dice':
            s = jax.nn.sigmoid(z)
            h = a * (1.0 - s) * z + s * z
        else:
            h = jnp.maximum(z, 0.0)
    w_fc, b_fc = params['fc']
    return (h @ w_fc.T + b_fc)[..., 0]


def _init_params(key, embedding_dim, hidden_units, activation):
    """Deterministic params; PyTorch-like uniform(+-1/sqrt(fan_in)) Linear init."""
    params = {'hidden': [], 'act': [], 'fc': None}
    in_dim = 4 * embedding_dim
    for unit in hidden_units:
        key, kw, kb, ka = jax.random.split(key, 4)
        bound = 1.0 / float(jnp.sqrt(jnp.float32(in_dim)))
        w = jax.random.uniform(kw, (unit, in_dim), jnp.float32, -bound, bound)
        b = jax.random.uniform(kb, (unit,), jnp.float32, -bound, bound)
        params['hidden'].append((w, b))
        if activation == 'prelu':
            params['act'].append(jnp.float32(0.25))        # nn.PReLU() default
        elif activation == 'dice':
            # Dice.alpha inits to 0 in the module; use a nonzero value so the alpha
            # term is actually exercised numerically.
            params['act'].append(jax.random.uniform(ka, (), jnp.float32, -0.5, 0.5))
        else:
            params['act'].append(jnp.float32(0.0))          # unused for relu
        in_dim = unit
    key, kw, kb = jax.random.split(key, 3)
    bound = 1.0 / float(jnp.sqrt(jnp.float32(in_dim)))
    w_fc = jax.random.uniform(kw, (1, in_dim), jnp.float32, -bound, bound)
    b_fc = jax.random.uniform(kb, (1,), jnp.float32, -bound, bound)
    params['fc'] = (w_fc, b_fc)
    return params


if __name__ == "__main__":
    B, T, E = 2, 8, 32               # batch, seq_len, embedding_dim  (att_input dim 4E = 128)
    HIDDEN_UNITS = (64, 32)

    key = jax.random.PRNGKey(0)
    kq, kk, kp = jax.random.split(key, 3)
    query = jax.random.normal(kq, (B, 1, E), dtype=jnp.float32)
    keys = jax.random.normal(kk, (B, T, E), dtype=jnp.float32)

    # bf16 MXU operands (with f32 accumulation) -> loosen tolerance vs f32 reference.
    ATOL = RTOL = 5e-2

    for act in ('prelu', 'dice', 'relu'):
        params = _init_params(kp, E, HIDDEN_UNITS, act)
        out = jax.block_until_ready(
            local_activation_unit(query, keys, params, activation=act))
        ref = jax.block_until_ready(_lau_ref(query, keys, params, act))
        assert out.shape == (B, T), (act, out.shape)
        assert jnp.allclose(out, ref, atol=ATOL, rtol=RTOL), f"mismatch vs reference ({act})"

    # Extra shapes: long-T tiling with a partial edge block, and partial batch block.
    params = _init_params(kp, E, HIDDEN_UNITS, 'prelu')
    q2 = jax.random.normal(kq, (2, 1, E), dtype=jnp.float32)
    k2 = jax.random.normal(kk, (2, 200, E), dtype=jnp.float32)
    out2 = jax.block_until_ready(
        local_activation_unit(q2, k2, params, activation='prelu', rows_per_step=128))
    assert out2.shape == (2, 200)
    assert jnp.allclose(out2, _lau_ref(q2, k2, params, 'prelu'), atol=ATOL, rtol=RTOL)

    q3 = jax.random.normal(kq, (5, 1, E), dtype=jnp.float32)
    k3 = jax.random.normal(kk, (5, 8, E), dtype=jnp.float32)
    out3 = jax.block_until_ready(
        local_activation_unit(q3, k3, params, activation='prelu', rows_per_step=16))
    assert out3.shape == (5, 8)
    assert jnp.allclose(out3, _lau_ref(q3, k3, params, 'prelu'), atol=ATOL, rtol=RTOL)

    print("KERNEL_OK")
</pallas_src>

<mosaic_0001>
module attributes {stable_mosaic.version = 11 : i64} {
  func.func @_lau_kernel(%arg0: i32, %arg1: i32, %arg2: memref<3xf32, #tpu.memory_space<smem>>, %arg3: memref<2x1x32xf32, #tpu.memory_space<vmem>>, %arg4: memref<2x1x64xf32, #tpu.memory_space<vmem>>, %arg5: memref<2x8x32xf32, #tpu.memory_space<vmem>>, %arg6: memref<32x64xbf16, #tpu.memory_space<vmem>>, %arg7: memref<32x64xbf16, #tpu.memory_space<vmem>>, %arg8: memref<64x32xbf16, #tpu.memory_space<vmem>>, %arg9: memref<1x32xf32, #tpu.memory_space<vmem>>, %arg10: memref<1x32xf32, #tpu.memory_space<vmem>>, %arg11: memref<2x1x8xf32, #tpu.memory_space<vmem>>) attributes {dimension_semantics = [#tpu.dimension_semantics<parallel>, #tpu.dimension_semantics<parallel>], iteration_bounds = array<i64: 1, 1>, scalar_prefetch = 0 : i64, scratch_operands = 0 : i64, tpu.core_type = #tpu.core_type<tc>, window_params = [{transform_indices = @transform_0, window_bounds = array<i64: 3>}, {transform_indices = @transform_1, window_bounds = array<i64: 2, 1, 32>}, {transform_indices = @transform_2, window_bounds = array<i64: 2, 1, 64>}, {transform_indices = @transform_3, window_bounds = array<i64: 2, 8, 32>}, {pipeline_mode = #tpu.pipeline_mode<synchronous>, transform_indices = @transform_4, window_bounds = array<i64: 32, 64>}, {pipeline_mode = #tpu.pipeline_mode<synchronous>, transform_indices = @transform_5, window_bounds = array<i64: 32, 64>}, {pipeline_mode = #tpu.pipeline_mode<synchronous>, transform_indices = @transform_6, window_bounds = array<i64: 64, 32>}, {pipeline_mode = #tpu.pipeline_mode<synchronous>, transform_indices = @transform_7, window_bounds = array<i64: 1, 32>}, {pipeline_mode = #tpu.pipeline_mode<synchronous>, transform_indices = @transform_8, window_bounds = array<i64: 1, 32>}, {transform_indices = @transform_9, window_bounds = array<i64: 2, 1, 8>}]} {
    %c0 = arith.constant 0 : index
    %c0_0 = arith.constant 0 : index
    %c0_1 = arith.constant 0 : index
    %0 = vector.load %arg5[%c0, %c0_0, %c0_1] : memref<2x8x32xf32, #tpu.memory_space<vmem>>, vector<2x8x32xf32>
    %c0_2 = arith.constant 0 : index
    %c0_3 = arith.constant 0 : index
    %c0_4 = arith.constant 0 : index
    %1 = vector.load %arg3[%c0_2, %c0_3, %c0_4] : memref<2x1x32xf32, #tpu.memory_space<vmem>>, vector<2x1x32xf32>
    %2 = vector.broadcast %1 : vector<2x1x32xf32> to vector<2x8x32xf32>
    %3 = arith.mulf %2, %0 : vector<2x8x32xf32>
    %4 = vector.shape_cast %0 : vector<2x8x32xf32> to vector<16x32xf32>
    %5 = vector.shape_cast %3 : vector<2x8x32xf32> to vector<16x32xf32>
    %c0_5 = arith.constant 0 : index
    %c0_6 = arith.constant 0 : index
    %6 = vector.load %arg6[%c0_5, %c0_6] : memref<32x64xbf16, #tpu.memory_space<vmem>>, vector<32x64xbf16>
    %c0_7 = arith.constant 0 : index
    %c0_8 = arith.constant 0 : index
    %7 = vector.load %arg7[%c0_7, %c0_8] : memref<32x64xbf16, #tpu.memory_space<vmem>>, vector<32x64xbf16>
    %8 = arith.truncf %4 : vector<16x32xf32> to vector<16x32xbf16>
    %cst = arith.constant dense<0.000000e+00> : vector<16x64xf32>
    %9 = tpu.matmul %8, %6, %cst {dimension_numbers = #tpu.dot_dimension_numbers<[1], [0], [0], [1], [0, 0, 1, 1], [], []>} : vector<16x32xbf16>, vector<32x64xbf16>, vector<16x64xf32> -> vector<16x64xf32>
    %10 = arith.truncf %5 : vector<16x32xf32> to vector<16x32xbf16>
    %cst_9 = arith.constant dense<0.000000e+00> : vector<16x64xf32>
    %11 = tpu.matmul %10, %7, %cst_9 {dimension_numbers = #tpu.dot_dimension_numbers<[1], [0], [0], [1], [0, 0, 1, 1], [], []>} : vector<16x32xbf16>, vector<32x64xbf16>, vector<16x64xf32> -> vector<16x64xf32>
    %12 = arith.addf %9, %11 : vector<16x64xf32>
    %13 = vector.shape_cast %12 : vector<16x64xf32> to vector<2x8x64xf32>
    %c0_10 = arith.constant 0 : index
    %c0_11 = arith.constant 0 : index
    %c0_12 = arith.constant 0 : index
    %14 = vector.load %arg4[%c0_10, %c0_11, %c0_12] : memref<2x1x64xf32, #tpu.memory_space<vmem>>, vector<2x1x64xf32>
    %15 = vector.broadcast %14 : vector<2x1x64xf32> to vector<2x8x64xf32>
    %16 = arith.addf %13, %15 : vector<2x8x64xf32>
    %c0_13 = arith.constant 0 : index
    %17 = memref.load %arg2[%c0_13] : memref<3xf32, #tpu.memory_space<smem>>
    %cst_14 = arith.constant 0.000000e+00 : f32
    %18 = vector.broadcast %cst_14 : f32 to vector<2x8x64xf32>
    %19 = arith.cmpf oge, %16, %18 : vector<2x8x64xf32>
    %20 = vector.broadcast %17 : f32 to vector<2x8x64xf32>
    %21 = arith.mulf %20, %16 : vector<2x8x64xf32>
    %22 = arith.select %19, %16, %21 : vector<2x8x64xi1>, vector<2x8x64xf32>
    %23 = vector.shape_cast %22 : vector<2x8x64xf32> to vector<16x64xf32>
    %c0_15 = arith.constant 0 : index
    %c0_16 = arith.constant 0 : index
    %24 = vector.load %arg8[%c0_15, %c0_16] : memref<64x32xbf16, #tpu.memory_space<vmem>>, vector<64x32xbf16>
    %c0_17 = arith.constant 0 : index
    %c0_18 = arith.constant 0 : index
    %25 = vector.load %arg9[%c0_17, %c0_18] : memref<1x32xf32, #tpu.memory_space<vmem>>, vector<1x32xf32>
    %26 = arith.truncf %23 : vector<16x64xf32> to vector<16x64xbf16>
    %cst_19 = arith.constant dense<0.000000e+00> : vector<16x32xf32>
    %27 = tpu.matmul %26, %24, %cst_19 {dimension_numbers = #tpu.dot_dimension_numbers<[1], [0], [0], [1], [0, 0, 1, 1], [], []>} : vector<16x64xbf16>, vector<64x32xbf16>, vector<16x32xf32> -> vector<16x32xf32>
    %28 = vector.broadcast %25 : vector<1x32xf32> to vector<16x32xf32>
    %29 = arith.addf %27, %28 : vector<16x32xf32>
    %c1 = arith.constant 1 : index
    %30 = memref.load %arg2[%c1] : memref<3xf32, #tpu.memory_space<smem>>
    %cst_20 = arith.constant 0.000000e+00 : f32
    %31 = vector.broadcast %cst_20 : f32 to vector<16x32xf32>
    %32 = arith.cmpf oge, %29, %31 : vector<16x32xf32>
    %33 = vector.broadcast %30 : f32 to vector<16x32xf32>
    %34 = arith.mulf %33, %29 : vector<16x32xf32>
    %35 = arith.select %32, %29, %34 : vector<16x32xi1>, vector<16x32xf32>
    %c0_21 = arith.constant 0 : index
    %c0_22 = arith.constant 0 : index
    %36 = vector.load %arg10[%c0_21, %c0_22] : memref<1x32xf32, #tpu.memory_space<vmem>>, vector<1x32xf32>
    %37 = vector.shape_cast %35 : vector<16x32xf32> to vector<2x8x32xf32>
    %38 = vector.shape_cast %36 : vector<1x32xf32> to vector<1x1x32xf32>
    %39 = vector.broadcast %38 : vector<1x1x32xf32> to vector<2x8x32xf32>
    %40 = arith.mulf %37, %39 : vector<2x8x32xf32>
    %cst_23 = arith.constant dense<0.000000e+00> : vector<2x8xf32>
    %41 = vector.multi_reduction <add>, %40, %cst_23 [2] : vector<2x8x32xf32> to vector<2x8xf32>
    %c2 = arith.constant 2 : index
    %42 = memref.load %arg2[%c2] : memref<3xf32, #tpu.memory_space<smem>>
    %43 = vector.broadcast %42 : f32 to vector<2x8xf32>
    %44 = arith.addf %41, %43 : vector<2x8xf32>
    %c0_24 = arith.constant 0 : index
    %c0_25 = arith.constant 0 : index
    %c0_26 = arith.constant 0 : index
    %45 = vector.load %arg11[%c0_24, %c0_25, %c0_26] : memref<2x1x8xf32, #tpu.memory_space<vmem>>, vector<2x1x8xf32>
    %46 = vector.shape_cast %45 : vector<2x1x8xf32> to vector<2x8xf32>
    %47 = vector.shape_cast %44 : vector<2x8xf32> to vector<2x1x8xf32>
    tpu.vector_store %arg11[%c0_24, %c0_25, %c0_26], %47 {strides = array<i32>} : memref<2x1x8xf32, #tpu.memory_space<vmem>>, vector<2x1x8xf32>,
    return
  }
  func.func @transform_0(%arg0: i32, %arg1: i32) -> i32 {
    %c0_i32 = arith.constant 0 : i32
    %c0_i32_0 = arith.constant 0 : i32
    return %c0_i32 : i32
  }
  func.func @transform_1(%arg0: i32, %arg1: i32) -> (i32, i32, i32) {
    %c0_i32 = arith.constant 0 : i32
    %c0_i32_0 = arith.constant 0 : i32
    %c0_i32_1 = arith.constant 0 : i32
    return %arg0, %c0_i32, %c0_i32_0 : i32, i32, i32
  }
  func.func @transform_2(%arg0: i32, %arg1: i32) -> (i32, i32, i32) {
    %c0_i32 = arith.constant 0 : i32
    %c0_i32_0 = arith.constant 0 : i32
    %c0_i32_1 = arith.constant 0 : i32
    return %arg0, %c0_i32, %c0_i32_0 : i32, i32, i32
  }
  func.func @transform_3(%arg0: i32, %arg1: i32) -> (i32, i32, i32) {
    %c0_i32 = arith.constant 0 : i32
    %c0_i32_0 = arith.constant 0 : i32
    return %arg0, %arg1, %c0_i32 : i32, i32, i32
  }
  func.func @transform_4(%arg0: i32, %arg1: i32) -> (i32, i32) {
    %c0_i32 = arith.constant 0 : i32
    %c0_i32_0 = arith.constant 0 : i32
    %c0_i32_1 = arith.constant 0 : i32
    return %c0_i32, %c0_i32_0 : i32, i32
  }
  func.func @transform_5(%arg0: i32, %arg1: i32) -> (i32, i32) {
    %c0_i32 = arith.constant 0 : i32
    %c0_i32_0 = arith.constant 0 : i32
    %c0_i32_1 = arith.constant 0 : i32
    return %c0_i32, %c0_i32_0 : i32, i32
  }
  func.func @transform_6(%arg0: i32, %arg1: i32) -> (i32, i32) {
    %c0_i32 = arith.constant 0 : i32
    %c0_i32_0 = arith.constant 0 : i32
    %c0_i32_1 = arith.constant 0 : i32
    return %c0_i32, %c0_i32_0 : i32, i32
  }
  func.func @transform_7(%arg0: i32, %arg1: i32) -> (i32, i32) {
    %c0_i32 = arith.constant 0 : i32
    %c0_i32_0 = arith.constant 0 : i32
    %c0_i32_1 = arith.constant 0 : i32
    return %c0_i32, %c0_i32_0 : i32, i32
  }
  func.func @transform_8(%arg0: i32, %arg1: i32) -> (i32, i32) {
    %c0_i32 = arith.constant 0 : i32
    %c0_i32_0 = arith.constant 0 : i32
    %c0_i32_1 = arith.constant 0 : i32
    return %c0_i32, %c0_i32_0 : i32, i32
  }
  func.func @transform_9(%arg0: i32, %arg1: i32) -> (i32, i32, i32) {
    %c0_i32 = arith.constant 0 : i32
    %c0_i32_0 = arith.constant 0 : i32
    return %arg0, %c0_i32, %arg1 : i32, i32, i32
  }
}

</mosaic_0001>

<llo_original>
// kernel: tpu_custom_call.1
$region0: #{tpu_custom_call.1}
  #allocation0 [shape = 'u32[]', space=smem, size = 0x4, offset = 0x4, fixed_abs, tag = 'smem constant byte address 0x4 - core index']
  #allocation1 [shape = 'u32[144,128]{1,0:T(1,128)}', space=vmem, size = 0x12000, scoped, tag = 'internal scratch']
  %s0 = inlined_call_operand.hbm [shape: f32[3], index: 0, kind: input, shape index: {}]
  %s1 = inlined_call_operand.vmem [shape: f32[2,1,32], index: 1, kind: input, shape index: {}]
  %s2 = inlined_call_operand.vmem [shape: f32[2,1,64], index: 2, kind: input, shape index: {}]
  %s3 = inlined_call_operand.vmem [shape: f32[2,8,32], index: 3, kind: input, shape index: {}]
  %s4 = inlined_call_operand.vmem [shape: bf16[32,64], index: 4, kind: input, shape index: {}]
  %s5 = inlined_call_operand.vmem [shape: bf16[32,64], index: 5, kind: input, shape index: {}]
  %s6 = inlined_call_operand.vmem [shape: bf16[64,32], index: 6, kind: input, shape index: {}]
  %s7 = inlined_call_operand.vmem [shape: f32[1,32], index: 7, kind: input, shape index: {}]
  %s8 = inlined_call_operand.vmem [shape: f32[1,32], index: 8, kind: input, shape index: {}]
  %s9 = inlined_call_operand.hbm [shape: f32[2,1,8], index: 9, kind: output, shape index: {}]
  %s10 = sld [smem:[#allocation0]]
  $region50: #{tpu_custom_call.1} parent=0
    _
  %s12 = ssub.s32 1, %s10
  %s13 = scalar_select 0, %s12, %s10
  $region1: #{tpu_custom_call.1} parent=0
    #allocation2 [shape = 'u8[512]{0}', space=smem, size = 0x200, scoped, tag = 'input window, operand 0, single buffered']
    #allocation3 [shape = 's32[1]{0}', space=sflag, size = 0x4, scoped, tag = 'scoped memory for tpu_custom_call.1']
    #allocation4 [shape = 's32[1]{0}', space=sflag, size = 0x4, scoped, tag = 'scoped memory for tpu_custom_call.1']
    #allocation5 [shape = 'u8[1024]{0}', space=vmem, size = 0x400, scoped, tag = 'output window, operand 0, single buffered']
    %14 = vsyncpa [#allocation4], 0
    %15 = vsyncpa [#allocation3], 0
    // Predicated region
    $region2: #{tpu_custom_call.1} parent=1 // pred_check
      _
    $region3: #{tpu_custom_call.1} parent=1 // pred_check_branch
      %17 = sbr.rel (0) target = $region5
    $region4: #{tpu_custom_call.1} parent=1 // pred_region
      %s19 = ssub.s32 16, 16
      %20 = vsyncadd [#allocation4], %s19
      %23 = dma.hbm_to_smem %s0, 16, [#allocation2], [#allocation4]
    $region5: #{tpu_custom_call.1} parent=1 // pred_fallthru
      _
    // Predicated region
    $region6: #{tpu_custom_call.1} parent=1 // pred_check
      _
    $region7: #{tpu_custom_call.1} parent=1 // pred_check_branch
      %25 = sbr.rel (0) target = $region9
    $region8: #{tpu_custom_call.1} parent=1 // pred_region
      _
    $region9: #{tpu_custom_call.1} parent=1 // pred_fallthru
      _
    // Predicated region
    $region10: #{tpu_custom_call.1} parent=1 // pred_check
      _
    $region11: #{tpu_custom_call.1} parent=1 // pred_check_branch
      %27 = sbr.rel (0) target = $region13
    $region12: #{tpu_custom_call.1} parent=1 // pred_region
      _
    $region13: #{tpu_custom_call.1} parent=1 // pred_fallthru
      _
    // Predicated region
    $region14: #{tpu_custom_call.1} parent=1 // pred_check
      _
    $region15: #{tpu_custom_call.1} parent=1 // pred_check_branch
      %29 = sbr.rel (0) target = $region17
    $region16: #{tpu_custom_call.1} parent=1 // pred_region
      _
    $region17: #{tpu_custom_call.1} parent=1 // pred_fallthru
      _
    // Predicated region
    $region18: #{tpu_custom_call.1} parent=1 // pred_check
      _
    $region19: #{tpu_custom_call.1} parent=1 // pred_check_branch
      %31 = sbr.rel (0) target = $region21
    $region20: #{tpu_custom_call.1} parent=1 // pred_region
      _
    $region21: #{tpu_custom_call.1} parent=1 // pred_fallthru
      _
    // Predicated region
    $region22: #{tpu_custom_call.1} parent=1 // pred_check
      _
    $region23: #{tpu_custom_call.1} parent=1 // pred_check_branch
      %33 = sbr.rel (0) target = $region25
    $region24: #{tpu_custom_call.1} parent=1 // pred_region
      _
    $region25: #{tpu_custom_call.1} parent=1 // pred_fallthru
      _
    // Predicated region
    $region26: #{tpu_custom_call.1} parent=1 // pred_check
      _
    $region27: #{tpu_custom_call.1} parent=1 // pred_check_branch
      %35 = sbr.rel (0) target = $region29
    $region28: #{tpu_custom_call.1} parent=1 // pred_region
      _
    $region29: #{tpu_custom_call.1} parent=1 // pred_fallthru
      _
    // Predicated region
    $region30: #{tpu_custom_call.1} parent=1 // pred_check
      _
    $region31: #{tpu_custom_call.1} parent=1 // pred_check_branch
      %37 = sbr.rel (0) target = $region33
    $region32: #{tpu_custom_call.1} parent=1 // pred_region
      _
    $region33: #{tpu_custom_call.1} parent=1 // pred_fallthru
      _
    // Predicated region
    $region34: #{tpu_custom_call.1} parent=1 // pred_check
      _
    $region35: #{tpu_custom_call.1} parent=1 // pred_check_branch
      %39 = sbr.rel (0) target = $region37
    $region36: #{tpu_custom_call.1} parent=1 // pred_region
      _
    $region37: #{tpu_custom_call.1} parent=1 // pred_fallthru
      _
    // Predicated region
    $region38: #{tpu_custom_call.1} parent=1 // pred_check
      _
    $region39: #{tpu_custom_call.1} parent=1 // pred_check_branch
      %41 = sbr.rel (0) target = $region41
    $region40: #{tpu_custom_call.1} parent=1 // pred_region
      %42 = dma.done [#allocation4], 16
    $region41: #{tpu_custom_call.1} parent=1 // pred_fallthru
      _
    %43 = sfence
    %v45 = vld [vmem:[%s3] sm:$0xff]
    %v46 = vld [vmem:[%s3 + $0x8] sm:$0xff]
    %v47 = vld [vmem:[%s1] sm:$0x1]
    %v48 = vld [vmem:[%s1 + $0x1] sm:$0x1]
    %v51 = vlaneseq
    %v52 = vshrl.u32 %v51, 7
    %v53 = vsub.s32 0, %v52
    %v54 = vrot.slane %v47, %v53
    %v55 = vlaneseq
    %v56 = vshrl.u32 %v55, 7
    %v57 = vsub.s32 0, %v56
    %v58 = vrot.slane %v48, %v57
    %v61 = vmul.f32 %v54, %v45
    %v62 = vmul.f32 %v58, %v46
    %v63 = vld [vmem:[%s4] sm:$0xf]
    %v64 = vld [vmem:[%s4 + $0x4] sm:$0xf]
    %v65 = vld [vmem:[%s4 + $0x8] sm:$0xf]
    %v66 = vld [vmem:[%s4 + $0xc] sm:$0xf]
    %v67 = vld [vmem:[%s5] sm:$0xf]
    %v68 = vld [vmem:[%s5 + $0x4] sm:$0xf]
    %v69 = vld [vmem:[%s5 + $0x8] sm:$0xf]
    %v70 = vld [vmem:[%s5 + $0xc] sm:$0xf]
    %v71 = vpack.c.bf16 %v46, %v45
    %v72 = vpack.c.bf16 %v62, %v61
    %v77 = vunpack.c.l.b16 %v67
    %v78 = vunpack.c.l.b16 %v68
    %v79 = vunpack.c.l.b16 %v69
    %v80 = vunpack.c.l.b16 %v70
    %v81 = vpack.c.b16 %v78, %v77
    %v82 = vpack.c.b16 %v80, %v79
    %vm85 = vcmask 261120
    %v87 = vsel %vm85, %v72, 0
    %89 = vmatprep.subr.bf16.mxu0 0
    %90 = vmatpush1.bf16.msra.mxu0 %v81
    %91 = vmatprep.subr.bf16.mxu0 0
    %92 = vmatpush1.bf16.msra.mxu0 %v82
    %93 = vmatprep.subr.bf16.mxu0 0
    %94 = vmatpush1.bf16.msra.mxu0 0
    %95 = vmatprep.subr.bf16.mxu0 0
    %96 = vmatpush1.bf16.msra.mxu0 0
    %97 = vmatprep.subr.bf16.mxu0 0
    %98 = vmatpush1.bf16.msra.mxu0 0
    %99 = vmatprep.subr.bf16.mxu0 0
    %100 = vmatpush1.bf16.msra.mxu0 0
    %101 = vmatprep.subr.bf16.mxu0 0
    %102 = vmatpush1.bf16.msra.mxu0 0
    %103 = vmatprep.subr.bf16.mxu0 0
    %104 = vmatpush1.bf16.msra.mxu0 0
    %105 = vmatprep.subr.bf16.mxu0 0
    %106 = vmatpush1.bf16.msra.mxu0 0
    %107 = vmatprep.subr.bf16.mxu0 0
    %108 = vmatpush1.bf16.msra.mxu0 0
    %109 = vmatprep.subr.bf16.mxu0 0
    %110 = vmatpush1.bf16.msra.mxu0 0
    %111 = vmatprep.subr.bf16.mxu0 0
    %112 = vmatpush1.bf16.msra.mxu0 0
    %113 = vmatprep.subr.bf16.mxu0 0
    %114 = vmatpush1.bf16.msra.mxu0 0
    %115 = vmatprep.subr.bf16.mxu0 0
    %116 = vmatpush1.bf16.msra.mxu0 0
    %117 = vmatprep.subr.bf16.mxu0 0
    %118 = vmatpush1.bf16.msra.mxu0 0
    %119 = vmatprep.subr.bf16.mxu0 0
    %120 = vmatpush1.bf16.msra.mxu0 0
    %121 = vmatprep.mubr.bf16.mxu0 0
    %122 = vmatmul.mubr.bf16.gmra.mrb[0].mxu0 %v87
    %v123 = vpop.f32.mrb[0].mxu0
    %v124 = vadd.f32 0.0, %v123
    %v125 = vpop.f32.mrb[0].mxu0
    %v126 = vpop.f32.mrb[0].mxu0
    %v127 = vadd.f32 0.0, %v126
    %v128 = vpop.f32.mrb[0].mxu0
    %129 = vdwg.mxu0
    %v134 = vunpack.c.l.b16 %v63
    %v135 = vunpack.c.l.b16 %v64
    %v136 = vunpack.c.l.b16 %v65
    %v137 = vunpack.c.l.b16 %v66
    %v138 = vpack.c.b16 %v135, %v134
    %v139 = vpack.c.b16 %v137, %v136
    %v143 = vsel %vm85, %v71, 0
    %145 = vmatprep.subr.bf16.mxu0 0
    %146 = vmatpush1.bf16.msra.mxu0 %v138
    %147 = vmatprep.subr.bf16.mxu0 0
    %148 = vmatpush1.bf16.msra.mxu0 %v139
    %149 = vmatprep.subr.bf16.mxu0 0
    %150 = vmatpush1.bf16.msra.mxu0 0
    %151 = vmatprep.subr.bf16.mxu0 0
    %152 = vmatpush1.bf16.msra.mxu0 0
    %153 = vmatprep.subr.bf16.mxu0 0
    %154 = vmatpush1.bf16.msra.mxu0 0
    %155 = vmatprep.subr.bf16.mxu0 0
    %156 = vmatpush1.bf16.msra.mxu0 0
    %157 = vmatprep.subr.bf16.mxu0 0
    %158 = vmatpush1.bf16.msra.mxu0 0
    %159 = vmatprep.subr.bf16.mxu0 0
    %160 = vmatpush1.bf16.msra.mxu0 0
    %161 = vmatprep.subr.bf16.mxu0 0
    %162 = vmatpush1.bf16.msra.mxu0 0
    %163 = vmatprep.subr.bf16.mxu0 0
    %164 = vmatpush1.bf16.msra.mxu0 0
    %165 = vmatprep.subr.bf16.mxu0 0
    %166 = vmatpush1.bf16.msra.mxu0 0
    %167 = vmatprep.subr.bf16.mxu0 0
    %168 = vmatpush1.bf16.msra.mxu0 0
    %169 = vmatprep.subr.bf16.mxu0 0
    %170 = vmatpush1.bf16.msra.mxu0 0
    %171 = vmatprep.subr.bf16.mxu0 0
    %172 = vmatpush1.bf16.msra.mxu0 0
    %173 = vmatprep.subr.bf16.mxu0 0
    %174 = vmatpush1.bf16.msra.mxu0 0
    %175 = vmatprep.subr.bf16.mxu0 0
    %176 = vmatpush1.bf16.msra.mxu0 0
    %177 = vmatprep.mubr.bf16.mxu0 0
    %178 = vmatmul.mubr.bf16.gmra.mrb[0].mxu0 %v143
    %v179 = vpop.f32.mrb[0].mxu0
    %v180 = vadd.f32 %v124, %v179
    %v181 = vpop.f32.mrb[0].mxu0
    %v182 = vpop.f32.mrb[0].mxu0
    %v183 = vadd.f32 %v127, %v182
    %v184 = vpop.f32.mrb[0].mxu0
    %185 = vdwg.mxu0
    %v186 = vld [vmem:[%s2] sm:$0x1]
    %v187 = vld [vmem:[%s2 + $0x1] sm:$0x1]
    %v190 = vlaneseq
    %v191 = vshrl.u32 %v190, 7
    %v192 = vsub.s32 0, %v191
    %v193 = vrot.slane %v186, %v192
    %v194 = vlaneseq
    %v195 = vshrl.u32 %v194, 7
    %v196 = vsub.s32 0, %v195
    %v197 = vrot.slane %v187, %v196
    %v200 = vadd.f32 %v180, %v193
    %v201 = vadd.f32 %v183, %v197
    %s202 = sld [smem:[#allocation2]]
    %vm203 = vcmp.ge.f32.partialorder %v200, 0.0
    %vm204 = vcmp.ge.f32.partialorder %v201, 0.0
    %v205 = vstv %s202
    %v206 = vmul.f32 %v205, %v200
    %v207 = vmul.f32 %v205, %v201
    %v208 = vsel %vm203, %v200, %v206
    %v209 = vsel %vm204, %v201, %v207
    %v210 = vld [vmem:[%s6] sm:$0xf]
    %v211 = vld [vmem:[%s6 + $0x4] sm:$0xf]
    %v212 = vld [vmem:[%s6 + $0x8] sm:$0xf]
    %v213 = vld [vmem:[%s6 + $0xc] sm:$0xf]
    %v214 = vld [vmem:[%s6 + $0x10] sm:$0xf]
    %v215 = vld [vmem:[%s6 + $0x14] sm:$0xf]
    %v216 = vld [vmem:[%s6 + $0x18] sm:$0xf]
    %v217 = vld [vmem:[%s6 + $0x1c] sm:$0xf]
    %v218 = vld [vmem:[%s7] sm:$0x1]
    %v219 = vpack.c.bf16 %v209, %v208
    %v221 = vlaneseq
    %v222 = vshrl.u32 %v221, 7
    %v223 = vsub.s32 0, %v222
    %v224 = vrot.slane %v218, %v223
    %v234 = vunpack.c.l.b16 %v210
    %v235 = vunpack.c.l.b16 %v211
    %v236 = vunpack.c.l.b16 %v212
    %v237 = vunpack.c.l.b16 %v213
    %v238 = vunpack.c.l.b16 %v214
    %v239 = vunpack.c.l.b16 %v215
    %v240 = vunpack.c.l.b16 %v216
    %v241 = vunpack.c.l.b16 %v217
    %v242 = vpack.c.b16 %v235, %v234
    %v243 = vpack.c.b16 %v237, %v236
    %v244 = vpack.c.b16 %v239, %v238
    %v245 = vpack.c.b16 %v241, %v240
    %vm250 = vcmask 523264
    %v252 = vsel %vm250, %v219, 0
    %254 = vmatprep.subr.bf16.mxu0 0
    %255 = vmatpush1.bf16.msra.mxu0 %v242
    %256 = vmatprep.subr.bf16.mxu0 0
    %257 = vmatpush1.bf16.msra.mxu0 %v243
    %258 = vmatprep.subr.bf16.mxu0 0
    %259 = vmatpush1.bf16.msra.mxu0 %v244
    %260 = vmatprep.subr.bf16.mxu0 0
    %261 = vmatpush1.bf16.msra.mxu0 %v245
    %262 = vmatprep.subr.bf16.mxu0 0
    %263 = vmatpush1.bf16.msra.mxu0 0
    %264 = vmatprep.subr.bf16.mxu0 0
    %265 = vmatpush1.bf16.msra.mxu0 0
    %266 = vmatprep.subr.bf16.mxu0 0
    %267 = vmatpush1.bf16.msra.mxu0 0
    %268 = vmatprep.subr.bf16.mxu0 0
    %269 = vmatpush1.bf16.msra.mxu0 0
    %270 = vmatprep.subr.bf16.mxu0 0
    %271 = vmatpush1.bf16.msra.mxu0 0
    %272 = vmatprep.subr.bf16.mxu0 0
    %273 = vmatpush1.bf16.msra.mxu0 0
    %274 = vmatprep.subr.bf16.mxu0 0
    %275 = vmatpush1.bf16.msra.mxu0 0
    %276 = vmatprep.subr.bf16.mxu0 0
    %277 = vmatpush1.bf16.msra.mxu0 0
    %278 = vmatprep.subr.bf16.mxu0 0
    %279 = vmatpush1.bf16.msra.mxu0 0
    %280 = vmatprep.subr.bf16.mxu0 0
    %281 = vmatpush1.bf16.msra.mxu0 0
    %282 = vmatprep.subr.bf16.mxu0 0
    %283 = vmatpush1.bf16.msra.mxu0 0
    %284 = vmatprep.subr.bf16.mxu0 0
    %285 = vmatpush1.bf16.msra.mxu0 0
    %286 = vmatprep.mubr.bf16.mxu0 0
    %287 = vmatmul.mubr.bf16.gmra.mrb[0].mxu0 %v252
    %v288 = vpop.f32.mrb[0].mxu0
    %v289 = vadd.f32 %v224, %v288
    %v290 = vpop.f32.mrb[0].mxu0
    %v291 = vpop.f32.mrb[0].mxu0
    %v292 = vadd.f32 %v224, %v291
    %v293 = vpop.f32.mrb[0].mxu0
    %294 = vdwg.mxu0
    %s295 = sld [smem:[#allocation2 + $0x1]]
    %vm296 = vcmp.ge.f32.partialorder %v289, 0.0
    %vm297 = vcmp.ge.f32.partialorder %v292, 0.0
    %v298 = vstv %s295
    %v299 = vmul.f32 %v298, %v289
    %v300 = vmul.f32 %v298, %v292
    %v301 = vsel %vm296, %v289, %v299
    %v302 = vsel %vm297, %v292, %v300
    %v303 = vld [vmem:[%s8] sm:$0x1]
    %v305 = vlaneseq
    %v306 = vshrl.u32 %v305, 7
    %v307 = vsub.s32 0, %v306
    %v308 = vrot.slane %v303, %v307
    %v310 = vmul.f32 %v301, %v308
    %v311 = vmul.f32 %v302, %v308
    %v312 = vsel %vm85, %v310, 0.0
    %313 = vadd.xlane.f32.xlu0 %v312
    %v314 = vpop.xlane.xlu0 %313
    %v315 = vsel %vm85, %v311, 0.0
    %316 = vadd.xlane.f32.xlu0 %v315
    %v317 = vpop.xlane.xlu0 %316
    %s318 = sld [smem:[#allocation2 + $0x2]]
    %v319 = vstv %s318
    %v320 = vadd.f32 %v314, %v319
    %v321 = vadd.f32 %v317, %v319
    %v324 = vlaneseq
    %v325 = vand.u32 %v324, 127
    %v326 = vlaneseq
    %v327 = vshrl.u32 %v326, 7
    %v328 = vsub.s32 %v325, %v327
    %v329 = vrot.slane %v320, %v328
    %v330 = vlaneseq
    %v331 = vshrl.u32 %v330, 7
    %v332 = vsub.s32 %v325, %v331
    %v333 = vrot.slane %v321, %v332
    %vm336 = vcmask 57344
    %337 = vst.msk [vmem:[#allocation5] sm:$0x1] %vm336, %v329
    %338 = vst.msk [vmem:[#allocation5 + $0x1] sm:$0x1] %vm336, %v333
    // Predicated region
    $region42: #{tpu_custom_call.1} parent=1 // pred_check
      _
    $region43: #{tpu_custom_call.1} parent=1 // pred_check_branch
      %340 = sbr.rel (0) target = $region45
    $region44: #{tpu_custom_call.1} parent=1 // pred_region
      %s342 = ssub.s32 32, 32
      %343 = vsyncadd [#allocation3], %s342
      %s344 = sshll.u32 [#allocation5], 4
      %s345 = int_to_ptr.vmem [resolvable:$true] %s344
      %350 = dma.vmem_to_hbm [thread:$0]  %s345, 32, %s9, [#allocation3], 16, 16, 1
    $region45: #{tpu_custom_call.1} parent=1 // pred_fallthru
      _
    // Predicated region
    $region46: #{tpu_custom_call.1} parent=1 // pred_check
      _
    $region47: #{tpu_custom_call.1} parent=1 // pred_check_branch
      %352 = sbr.rel (0) target = $region49
    $region48: #{tpu_custom_call.1} parent=1 // pred_region
      %353 = dma.done [#allocation3], 32
    $region49: #{tpu_custom_call.1} parent=1 // pred_fallthru
      _
    %354 = vsyncpa [#allocation3], 1
    %355 = vsyncpa [#allocation4], 1

</llo_original>
